<compile_context>
chip_gen: v7x
topology: tpu7x:2x2x1
jax: 0.10.0
libtpu: 0.0.40
codegen_flags: <defaults>
</compile_context>

<pallas_src>
import jax
import jax.numpy as jnp
from jax.experimental import pallas as pl
from jax.experimental.pallas import tpu as pltpu


def _round_up(x, m):
    return ((x + m - 1) // m) * m


# --------------------------------------------------------------------------
# Kernels
# --------------------------------------------------------------------------

def _linear_bias_single_kernel(x_ref, wt_ref, b_ref, o_ref):
    """Single K step: out = x @ wt + b. No accumulator, no pl.when."""
    xa = x_ref[...].astype(wt_ref.dtype)
    o_ref[...] = (jnp.dot(xa, wt_ref[...], preferred_element_type=jnp.float32)
                  + b_ref[...].astype(jnp.float32)).astype(o_ref.dtype)


def _linear_bias_acc_kernel(x_ref, wt_ref, b_ref, o_ref):
    """K tiled: accumulate directly into the f32 output block (it is resident
    across the K axis because its block index ignores k). Bias seeds step 0."""
    @pl.when(pl.program_id(2) == 0)
    def _():
        o_ref[...] = jnp.broadcast_to(b_ref[...].astype(jnp.float32),
                                      o_ref.shape)

    xa = x_ref[...].astype(wt_ref.dtype)
    o_ref[...] += jnp.dot(xa, wt_ref[...], preferred_element_type=jnp.float32)


# --------------------------------------------------------------------------
# Load-time weight preparation (run ONCE, not in the per-step hot path)
# --------------------------------------------------------------------------

def merge_lora_weights(weight, bias, lora_A, lora_B, *, lora_alpha=16, r=8,
                       weight_dtype=jnp.bfloat16, tn=None, tk=None):
    """Fold LoRA (+ scaling) into the frozen base weight, pre-transpose,
    zero-pad to tile multiples and cast to the storage dtype.

    weight: (Out, In); bias: (Out,); lora_A: (r, In); lora_B: (Out, r).
    Returns a dict with the padded (K_pad, N_pad) transposed weight, the
    padded (1, N_pad) f32 bias and the chosen (tn, tk) tiles.
    """
    out_features, in_features = weight.shape
    scaling = float(lora_alpha) / float(r)
    w_eff = weight + scaling * jnp.dot(lora_B, lora_A,
                                       precision=jax.lax.Precision.HIGHEST)
    wt = w_eff.T  # (In, Out)

    # K tile: full (128-aligned) K if it fits, else an exact divisor of K_pad
    # (kills the 33% padding waste that a fixed 512 tile would cause for 768).
    K_pad = _round_up(in_features, 128)
    if tk is None:
        if K_pad <= 1024:
            tk = K_pad
        else:
            tk = next(c for c in (1024, 896, 768, 640, 512, 384, 256, 128)
                      if K_pad % c == 0)
    assert tk % 128 == 0 and K_pad % tk == 0

    # N tile: lane-dense (multiple of 128) so output stores are unmasked.
    if tn is None:
        tn = min(512, _round_up(out_features, 128))
    assert tn % 128 == 0
    N_pad = _round_up(out_features, tn)

    wt_p = jnp.pad(wt, ((0, K_pad - in_features), (0, N_pad - out_features)))
    wt_p = wt_p.astype(weight_dtype)
    b_p = jnp.pad(bias.reshape(1, -1).astype(jnp.float32),
                  ((0, 0), (0, N_pad - out_features)))

    return dict(wt=wt_p, b=b_p, in_features=in_features,
                out_features=out_features, tn=tn, tk=tk)


# --------------------------------------------------------------------------
# Per-call forward
# --------------------------------------------------------------------------

def lora_classifier_forward(x, merged, *, tm=None):
    """logits = x @ W_eff^T + b using the pre-merged / pre-padded weights.

    x: (B, In). Returns (B, Out) in x.dtype.
    """
    wt_p, b_p = merged["wt"], merged["b"]
    In, Out = merged["in_features"], merged["out_features"]
    tn, tk = merged["tn"], merged["tk"]
    K_pad, N_pad = wt_p.shape

    B = x.shape[0]
    assert x.shape[1] == In, "x must be (batch, in_features)"

    # M tile: >= 2 blocks once batch >= 16 so the parallel M axis can be
    # sharded across both TensorCores on v7x (single-TC chips unaffected).
    if tm is None:
        if B < 16:
            tm = _round_up(max(B, 1), 8)
        else:
            tm = min(256, _round_up((B + 1) // 2, 8))
    assert tm % 8 == 0
    M_pad = _round_up(B, tm)

    # Only x is padded per call (weight/bias padding was done once at load).
    x_p = jnp.pad(x, ((0, M_pad - B), (0, K_pad - In)))

    ni, nj, nk = M_pad // tm, N_pad // tn, K_pad // tk

    if nk == 1:
        grid = (ni, nj)
        kernel = _linear_bias_single_kernel
        in_specs = [
            pl.BlockSpec((tm, tk), lambda i, j: (i, 0)),   # x tile
            pl.BlockSpec((tk, tn), lambda i, j: (0, j)),   # merged weight tile
            pl.BlockSpec((1, tn), lambda i, j: (0, j)),    # bias tile
        ]
        out_specs = pl.BlockSpec((tm, tn), lambda i, j: (i, j))
        dim_sem = ("parallel", "parallel")
    else:
        grid = (ni, nj, nk)
        kernel = _linear_bias_acc_kernel
        in_specs = [
            pl.BlockSpec((tm, tk), lambda i, j, k: (i, k)),
            pl.BlockSpec((tk, tn), lambda i, j, k: (k, j)),
            pl.BlockSpec((1, tn), lambda i, j, k: (0, j)),
        ]
        out_specs = pl.BlockSpec((tm, tn), lambda i, j, k: (i, j))
        dim_sem = ("parallel", "parallel", "arbitrary")

    out_p = pl.pallas_call(
        kernel,
        out_shape=jax.ShapeDtypeStruct((M_pad, N_pad), jnp.float32),
        grid_spec=pltpu.PrefetchScalarGridSpec(
            num_scalar_prefetch=0,
            grid=grid,
            in_specs=in_specs,
            out_specs=out_specs,
        ),
        compiler_params=pltpu.CompilerParams(
            dimension_semantics=dim_sem,
            vmem_limit_bytes=32 * 1024 * 1024,
        ),
    )(x_p, wt_p, b_p)

    out = out_p[:B, :Out]
    return out if out.dtype == x.dtype else out.astype(x.dtype)


def lora_linear(x, weight, bias, lora_A, lora_B, *, lora_alpha=16, r=8,
                weight_dtype=jnp.bfloat16, tm=None, tn=None, tk=None):
    """Drop-in LoRALinear.forward (eval mode). In a real model the merge runs
    once at load time; it is kept here only to mirror the PyTorch signature."""
    merged = merge_lora_weights(weight, bias, lora_A, lora_B,
                                lora_alpha=lora_alpha, r=r,
                                weight_dtype=weight_dtype, tn=tn, tk=tk)
    return lora_classifier_forward(x, merged, tm=tm)


def lora_linear_ref(x, weight, bias, lora_A, lora_B, *, lora_alpha=16, r=8):
    scaling = lora_alpha / r
    pr = jax.lax.Precision.HIGHEST
    base = jnp.dot(x, weight.T, precision=pr) + bias
    lora = jnp.dot(jnp.dot(x, lora_A.T, precision=pr), lora_B.T, precision=pr)
    return base + scaling * lora


if __name__ == "__main__":
    key = jax.random.PRNGKey(0)
    r, lora_alpha = 8, 16

    def make_params(k, in_features, out_features):
        k_w, k_a, k_b = jax.random.split(k, 3)
        weight = jax.random.normal(k_w, (out_features, in_features),
                                   dtype=jnp.float32) * 0.02
        bias = jnp.zeros((out_features,), dtype=jnp.float32)
        lora_A = jax.random.uniform(
            k_a, (r, in_features), dtype=jnp.float32,
            minval=-1.0 / jnp.sqrt(in_features),
            maxval=1.0 / jnp.sqrt(in_features))
        lora_B = jax.random.uniform(
            k_b, (out_features, r), dtype=jnp.float32,
            minval=-1.0 / jnp.sqrt(r), maxval=1.0 / jnp.sqrt(r))
        return weight, bias, lora_A, lora_B

    # ---- Case 1: sentiment head at small scale, bf16 merged weight, single
    #      grid K step (fast path): (batch, hidden) -> (batch, num_labels).
    k1, k2, key = jax.random.split(key, 3)
    batch, hidden, num_labels = 8, 128, 5
    x1 = jax.random.normal(k1, (batch, hidden), dtype=jnp.float32)
    w1, b1, a1, bb1 = make_params(k2, hidden, num_labels)
    merged1 = merge_lora_weights(w1, b1, a1, bb1, lora_alpha=lora_alpha, r=r,
                                 weight_dtype=jnp.bfloat16)
    out1 = jax.block_until_ready(lora_classifier_forward(x1, merged1))
    assert out1.shape == (batch, num_labels)
    # tight check against the identical bf16 computation done by XLA
    wt_bf16 = merged1["wt"][:hidden, :num_labels]
    ref1_bf16 = jnp.dot(x1.astype(jnp.bfloat16), wt_bf16,
                        preferred_element_type=jnp.float32) + b1
    assert jnp.allclose(out1, ref1_bf16, atol=1e-3, rtol=1e-3), "case 1 (bf16 ref)"
    # loose check against the full-f32 two-matmul LoRA reference
    ref1 = lora_linear_ref(x1, w1, b1, a1, bb1, lora_alpha=lora_alpha, r=r)
    assert jnp.allclose(out1, ref1, atol=5e-2, rtol=5e-2), "case 1 (f32 ref)"

    # ---- Case 2: force small tiles so the (M, N, K) grid runs multiple steps
    #      on every axis (exercises accumulate-into-output + padding logic),
    #      f32 weights for a tight numerical check.
    k3, k4, key = jax.random.split(key, 3)
    batch2, in2, out_feat2 = 16, 384, 200
    x2 = jax.random.normal(k3, (batch2, in2), dtype=jnp.float32)
    p2 = make_params(k4, in2, out_feat2)
    out2 = jax.block_until_ready(
        lora_linear(x2, *p2, lora_alpha=lora_alpha, r=r,
                    weight_dtype=jnp.float32, tm=8, tn=128, tk=128))
    ref2 = lora_linear_ref(x2, *p2, lora_alpha=lora_alpha, r=r)
    assert out2.shape == (batch2, out_feat2)
    assert jnp.allclose(out2, ref2, atol=1e-3, rtol=1e-3), "case 2 mismatch"

    print("KERNEL_OK")
</pallas_src>

<mosaic_0001>
module attributes {stable_mosaic.version = 11 : i64} {
  func.func @_linear_bias_single_kernel(%arg0: i32, %arg1: i32, %arg2: memref<8x128xf32, #tpu.memory_space<vmem>>, %arg3: memref<128x128xbf16, #tpu.memory_space<vmem>>, %arg4: memref<1x128xf32, #tpu.memory_space<vmem>>, %arg5: memref<8x128xf32, #tpu.memory_space<vmem>>) attributes {dimension_semantics = [#tpu.dimension_semantics<parallel>, #tpu.dimension_semantics<parallel>], iteration_bounds = array<i64: 1, 1>, scalar_prefetch = 0 : i64, scratch_operands = 0 : i64, tpu.core_type = #tpu.core_type<tc>, window_params = [{transform_indices = @transform_0, window_bounds = array<i64: 8, 128>}, {transform_indices = @transform_1, window_bounds = array<i64: 128, 128>}, {transform_indices = @transform_2, window_bounds = array<i64: 1, 128>}, {transform_indices = @transform_3, window_bounds = array<i64: 8, 128>}]} {
    %c0 = arith.constant 0 : index
    %c0_0 = arith.constant 0 : index
    %0 = vector.load %arg2[%c0, %c0_0] : memref<8x128xf32, #tpu.memory_space<vmem>>, vector<8x128xf32>
    %1 = arith.truncf %0 : vector<8x128xf32> to vector<8x128xbf16>
    %c0_1 = arith.constant 0 : index
    %c0_2 = arith.constant 0 : index
    %2 = vector.load %arg3[%c0_1, %c0_2] : memref<128x128xbf16, #tpu.memory_space<vmem>>, vector<128x128xbf16>
    %cst = arith.constant dense<0.000000e+00> : vector<8x128xf32>
    %3 = tpu.matmul %1, %2, %cst {dimension_numbers = #tpu.dot_dimension_numbers<[1], [0], [0], [1], [0, 0, 1, 1], [], []>} : vector<8x128xbf16>, vector<128x128xbf16>, vector<8x128xf32> -> vector<8x128xf32>
    %c0_3 = arith.constant 0 : index
    %c0_4 = arith.constant 0 : index
    %4 = vector.load %arg4[%c0_3, %c0_4] : memref<1x128xf32, #tpu.memory_space<vmem>>, vector<1x128xf32>
    %5 = vector.broadcast %4 : vector<1x128xf32> to vector<8x128xf32>
    %6 = arith.addf %3, %5 : vector<8x128xf32>
    %c0_5 = arith.constant 0 : index
    %c0_6 = arith.constant 0 : index
    %7 = vector.load %arg5[%c0_5, %c0_6] : memref<8x128xf32, #tpu.memory_space<vmem>>, vector<8x128xf32>
    tpu.vector_store %arg5[%c0_5, %c0_6], %6 {strides = array<i32>} : memref<8x128xf32, #tpu.memory_space<vmem>>, vector<8x128xf32>,
    return
  }
  func.func @transform_0(%arg0: i32, %arg1: i32) -> (i32, i32) {
    %c0_i32 = arith.constant 0 : i32
    %c0_i32_0 = arith.constant 0 : i32
    return %arg0, %c0_i32 : i32, i32
  }
  func.func @transform_1(%arg0: i32, %arg1: i32) -> (i32, i32) {
    %c0_i32 = arith.constant 0 : i32
    %c0_i32_0 = arith.constant 0 : i32
    return %c0_i32, %arg1 : i32, i32
  }
  func.func @transform_2(%arg0: i32, %arg1: i32) -> (i32, i32) {
    %c0_i32 = arith.constant 0 : i32
    %c0_i32_0 = arith.constant 0 : i32
    return %c0_i32, %arg1 : i32, i32
  }
  func.func @transform_3(%arg0: i32, %arg1: i32) -> (i32, i32) {
    %c0_i32 = arith.constant 0 : i32
    return %arg0, %arg1 : i32, i32
  }
}

</mosaic_0001>

<llo_original>
// kernel: tpu_custom_call.1
$region0: #{tpu_custom_call.1}
  #allocation0 [shape = 'u32[]', space=smem, size = 0x4, offset = 0x4, fixed_abs, tag = 'smem constant byte address 0x4 - core index']
  #allocation1 [shape = 'u32[144,128]{1,0:T(1,128)}', space=vmem, size = 0x12000, scoped, tag = 'internal scratch']
  %s0 = inlined_call_operand.hbm [shape: f32[8,128], index: 0, kind: input, shape index: {}]
  %s1 = inlined_call_operand.hbm [shape: bf16[128,128], index: 1, kind: input, shape index: {}]
  %s2 = inlined_call_operand.vmem [shape: f32[1,128], index: 2, kind: input, shape index: {}]
  %s3 = inlined_call_operand.hbm [shape: f32[8,128], index: 3, kind: output, shape index: {}]
  %s4 = sld [smem:[#allocation0]]
  $region30: #{tpu_custom_call.1} parent=0
    _
  %s6 = ssub.s32 1, %s4
  %s7 = scalar_select 0, %s6, %s4
  $region1: #{tpu_custom_call.1} parent=0
    #allocation2 [shape = 'u8[4096]{0}', space=vmem, size = 0x1000, scoped, tag = 'input window, operand 0, single buffered']
    #allocation3 [shape = 's32[1]{0}', space=sflag, size = 0x4, scoped, tag = 'scoped memory for tpu_custom_call.1']
    #allocation4 [shape = 's32[1]{0}', space=sflag, size = 0x4, scoped, tag = 'scoped memory for tpu_custom_call.1']
    #allocation5 [shape = 'u8[32768]{0}', space=vmem, size = 0x8000, scoped, tag = 'input window, operand 1, single buffered']
    #allocation6 [shape = 's32[1]{0}', space=sflag, size = 0x4, scoped, tag = 'scoped memory for tpu_custom_call.1']
    #allocation7 [shape = 'u8[4096]{0}', space=vmem, size = 0x1000, scoped, tag = 'output window, operand 0, single buffered']
    %8 = vsyncpa [#allocation3], 0
    %9 = vsyncpa [#allocation6], 0
    %10 = vsyncpa [#allocation4], 0
    // Predicated region
    $region2: #{tpu_custom_call.1} parent=1 // pred_check
      _
    $region3: #{tpu_custom_call.1} parent=1 // pred_check_branch
      %12 = sbr.rel (0) target = $region5
    $region4: #{tpu_custom_call.1} parent=1 // pred_region
      %s14 = ssub.s32 128, 128
      %15 = vsyncadd [#allocation3], %s14
      %s17 = sshll.u32 [#allocation2], 4
      %s18 = int_to_ptr.vmem [resolvable:$true] %s17
      %20 = dma.hbm_to_vmem [thread:$0]  %s0, 128, %s18, [#allocation3]
    $region5: #{tpu_custom_call.1} parent=1 // pred_fallthru
      _
    // Predicated region
    $region6: #{tpu_custom_call.1} parent=1 // pred_check
      _
    $region7: #{tpu_custom_call.1} parent=1 // pred_check_branch
      %22 = sbr.rel (0) target = $region9
    $region8: #{tpu_custom_call.1} parent=1 // pred_region
      %s24 = ssub.s32 1024, 1024
      %25 = vsyncadd [#allocation6], %s24
      %s26 = sshll.u32 [#allocation5], 4
      %s27 = int_to_ptr.vmem [resolvable:$true] %s26
      %32 = dma.hbm_to_vmem [thread:$0]  %s1, 1024, %s27, [#allocation6], 64, 64, 4
    $region9: #{tpu_custom_call.1} parent=1 // pred_fallthru
      _
    // Predicated region
    $region10: #{tpu_custom_call.1} parent=1 // pred_check
      _
    $region11: #{tpu_custom_call.1} parent=1 // pred_check_branch
      %34 = sbr.rel (0) target = $region13
    $region12: #{tpu_custom_call.1} parent=1 // pred_region
      _
    $region13: #{tpu_custom_call.1} parent=1 // pred_fallthru
      _
    // Predicated region
    $region14: #{tpu_custom_call.1} parent=1 // pred_check
      _
    $region15: #{tpu_custom_call.1} parent=1 // pred_check_branch
      %36 = sbr.rel (0) target = $region17
    $region16: #{tpu_custom_call.1} parent=1 // pred_region
      %37 = dma.done [#allocation3], 128
    $region17: #{tpu_custom_call.1} parent=1 // pred_fallthru
      _
    // Predicated region
    $region18: #{tpu_custom_call.1} parent=1 // pred_check
      _
    $region19: #{tpu_custom_call.1} parent=1 // pred_check_branch
      %39 = sbr.rel (0) target = $region21
    $region20: #{tpu_custom_call.1} parent=1 // pred_region
      %40 = dma.done [#allocation6], 1024
    $region21: #{tpu_custom_call.1} parent=1 // pred_fallthru
      _
    %v42 = vld [vmem:[#allocation2] sm:$0xff]
    %v43 = vpack.c.bf16 %v42, %v42
    %v44 = vld [vmem:[#allocation5] sm:$0xf]
    %v45 = vld [vmem:[#allocation5 + $0x4] sm:$0xf]
    %v46 = vld [vmem:[#allocation5 + $0x8] sm:$0xf]
    %v47 = vld [vmem:[#allocation5 + $0xc] sm:$0xf]
    %v48 = vld [vmem:[#allocation5 + $0x10] sm:$0xf]
    %v49 = vld [vmem:[#allocation5 + $0x14] sm:$0xf]
    %v50 = vld [vmem:[#allocation5 + $0x18] sm:$0xf]
    %v51 = vld [vmem:[#allocation5 + $0x1c] sm:$0xf]
    %v52 = vld [vmem:[#allocation5 + $0x20] sm:$0xf]
    %v53 = vld [vmem:[#allocation5 + $0x24] sm:$0xf]
    %v54 = vld [vmem:[#allocation5 + $0x28] sm:$0xf]
    %v55 = vld [vmem:[#allocation5 + $0x2c] sm:$0xf]
    %v56 = vld [vmem:[#allocation5 + $0x30] sm:$0xf]
    %v57 = vld [vmem:[#allocation5 + $0x34] sm:$0xf]
    %v58 = vld [vmem:[#allocation5 + $0x38] sm:$0xf]
    %v59 = vld [vmem:[#allocation5 + $0x3c] sm:$0xf]
    %v60 = vld [vmem:[%s2] sm:$0x1]
    %v62 = vlaneseq
    %v63 = vshrl.u32 %v62, 7
    %v64 = vsub.s32 0, %v63
    %v65 = vrot.slane %v60, %v64
    %v83 = vunpack.c.l.b16 %v44
    %v84 = vunpack.c.l.b16 %v45
    %v85 = vunpack.c.l.b16 %v46
    %v86 = vunpack.c.l.b16 %v47
    %v87 = vunpack.c.l.b16 %v48
    %v88 = vunpack.c.l.b16 %v49
    %v89 = vunpack.c.l.b16 %v50
    %v90 = vunpack.c.l.b16 %v51
    %v91 = vunpack.c.l.b16 %v52
    %v92 = vunpack.c.l.b16 %v53
    %v93 = vunpack.c.l.b16 %v54
    %v94 = vunpack.c.l.b16 %v55
    %v95 = vunpack.c.l.b16 %v56
    %v96 = vunpack.c.l.b16 %v57
    %v97 = vunpack.c.l.b16 %v58
    %v98 = vunpack.c.l.b16 %v59
    %v99 = vpack.c.b16 %v84, %v83
    %v100 = vpack.c.b16 %v86, %v85
    %v101 = vpack.c.b16 %v88, %v87
    %v102 = vpack.c.b16 %v90, %v89
    %v103 = vpack.c.b16 %v92, %v91
    %v104 = vpack.c.b16 %v94, %v93
    %v105 = vpack.c.b16 %v96, %v95
    %v106 = vpack.c.b16 %v98, %v97
    %115 = vmatprep.subr.bf16.mxu0 0
    %116 = vmatpush1.bf16.msra.mxu0 %v99
    %117 = vmatprep.subr.bf16.mxu0 0
    %118 = vmatpush1.bf16.msra.mxu0 %v100
    %119 = vmatprep.subr.bf16.mxu0 0
    %120 = vmatpush1.bf16.msra.mxu0 %v101
    %121 = vmatprep.subr.bf16.mxu0 0
    %122 = vmatpush1.bf16.msra.mxu0 %v102
    %123 = vmatprep.subr.bf16.mxu0 0
    %124 = vmatpush1.bf16.msra.mxu0 %v103
    %125 = vmatprep.subr.bf16.mxu0 0
    %126 = vmatpush1.bf16.msra.mxu0 %v104
    %127 = vmatprep.subr.bf16.mxu0 0
    %128 = vmatpush1.bf16.msra.mxu0 %v105
    %129 = vmatprep.subr.bf16.mxu0 0
    %130 = vmatpush1.bf16.msra.mxu0 %v106
    %131 = vmatprep.subr.bf16.mxu0 0
    %132 = vmatpush1.bf16.msra.mxu0 0
    %133 = vmatprep.subr.bf16.mxu0 0
    %134 = vmatpush1.bf16.msra.mxu0 0
    %135 = vmatprep.subr.bf16.mxu0 0
    %136 = vmatpush1.bf16.msra.mxu0 0
    %137 = vmatprep.subr.bf16.mxu0 0
    %138 = vmatpush1.bf16.msra.mxu0 0
    %139 = vmatprep.subr.bf16.mxu0 0
    %140 = vmatpush1.bf16.msra.mxu0 0
    %141 = vmatprep.subr.bf16.mxu0 0
    %142 = vmatpush1.bf16.msra.mxu0 0
    %143 = vmatprep.subr.bf16.mxu0 0
    %144 = vmatpush1.bf16.msra.mxu0 0
    %145 = vmatprep.subr.bf16.mxu0 0
    %146 = vmatpush1.bf16.msra.mxu0 0
    %147 = vmatprep.mubr.bf16.mxu0 0
    %148 = vmatmul.mubr.bf16.gmra.mrb[0].mxu0 %v43
    %v149 = vpop.f32.mrb[0].mxu0
    %v150 = vadd.f32 %v65, %v149
    %v151 = vpop.f32.mrb[0].mxu0
    %v152 = vpop.f32.mrb[0].mxu0
    %v153 = vpop.f32.mrb[0].mxu0
    %154 = vdwg.mxu0
    %155 = vst [vmem:[#allocation7] sm:$0xff] %v150
    // Predicated region
    $region22: #{tpu_custom_call.1} parent=1 // pred_check
      _
    $region23: #{tpu_custom_call.1} parent=1 // pred_check_branch
      %157 = sbr.rel (0) target = $region25
    $region24: #{tpu_custom_call.1} parent=1 // pred_region
      %s159 = ssub.s32 128, 128
      %160 = vsyncadd [#allocation4], %s159
      %s162 = sshll.u32 [#allocation7], 4
      %s163 = int_to_ptr.vmem [resolvable:$true] %s162
      %165 = dma.vmem_to_hbm [thread:$0]  %s163, 128, %s3, [#allocation4]
    $region25: #{tpu_custom_call.1} parent=1 // pred_fallthru
      _
    // Predicated region
    $region26: #{tpu_custom_call.1} parent=1 // pred_check
      _
    $region27: #{tpu_custom_call.1} parent=1 // pred_check_branch
      %167 = sbr.rel (0) target = $region29
    $region28: #{tpu_custom_call.1} parent=1 // pred_region
      %168 = dma.done [#allocation4], 128
    $region29: #{tpu_custom_call.1} parent=1 // pred_fallthru
      _
    %169 = vsyncpa [#allocation3], 1
    %170 = vsyncpa [#allocation6], 1
    %171 = vsyncpa [#allocation4], 1

</llo_original>
